<compile_context>
chip_gen: v7x
topology: tpu7x:2x2x1
jax: 0.10.0
libtpu: 0.0.40
codegen_flags: <defaults>
</compile_context>

<pallas_src>
import math

import jax
import jax.numpy as jnp
from jax import lax
from jax.experimental import pallas as pl
from jax.experimental.pallas import tpu as pltpu

EPS = 1e-5  # nn.LayerNorm default


# ---------------------------------------------------------------------------
# Kernel: fused LayerNorm -> fc1 -> ReLU -> fc2 on a (TM, D) row tile
# ---------------------------------------------------------------------------
def ffn_kernel(x_ref, g_ref, beta_ref, w1_ref, b1_ref, w2_ref, b2_ref, o_ref):
    x = x_ref[...]                                    # (TM, D) float32

    # LayerNorm (PyTorch nn.LayerNorm: biased variance, eps inside sqrt)
    mean = jnp.mean(x, axis=-1, keepdims=True)
    xc = x - mean
    var = jnp.mean(xc * xc, axis=-1, keepdims=True)
    inv = lax.rsqrt(var + EPS)                        # EUP rsqrt, no divide
    h = xc * inv * g_ref[...] + beta_ref[...]

    # fc1 + ReLU   (dropout1 = identity in eval mode)
    h = jnp.dot(h, w1_ref[...], preferred_element_type=jnp.float32) + b1_ref[...]
    h = jnp.maximum(h, 0.0)

    # fc2          (dropout2 = identity in eval mode)
    out = jnp.dot(h, w2_ref[...], preferred_element_type=jnp.float32) + b2_ref[...]
    o_ref[...] = out.astype(o_ref.dtype)


# ---------------------------------------------------------------------------
# Wrapper: flatten leading dims, tile rows, run one fused pallas_call
# ---------------------------------------------------------------------------
def _round_up(n, m):
    return (n + m - 1) // m * m


def feed_forward(x, gamma, beta, w1, b1, w2, b2, *, max_block_rows=256):
    orig_shape = x.shape
    D = orig_shape[-1]
    d_ff = w1.shape[1]

    # Flatten (B, T, D) -> (N, D): LayerNorm/FFN are purely per-row.
    x2 = x.reshape(-1, D)
    N = x2.shape[0]

    # Row tiling: multiples of 8 sublanes; keep >=2 tiles when possible so the
    # parallel grid axis can shard across v7x's two TensorCores.
    n_pad = _round_up(N, 8)
    if n_pad >= 16:
        tm = min(max_block_rows, n_pad // 2)
        tm = max(8, (tm // 8) * 8)
    else:
        tm = n_pad
    n_pad = _round_up(n_pad, tm)
    if n_pad != N:
        x2 = jnp.pad(x2, ((0, n_pad - N), (0, 0)))

    grid = (n_pad // tm,)

    resident = lambda i: (0, 0)  # weights: same block every step -> loaded once

    out = pl.pallas_call(
        ffn_kernel,
        grid=grid,
        in_specs=[
            pl.BlockSpec((tm, D), lambda i: (i, 0)),   # x rows
            pl.BlockSpec((1, D), resident),            # layernorm gamma
            pl.BlockSpec((1, D), resident),            # layernorm beta
            pl.BlockSpec((D, d_ff), resident),         # fc1 weight
            pl.BlockSpec((1, d_ff), resident),         # fc1 bias
            pl.BlockSpec((d_ff, D), resident),         # fc2 weight
            pl.BlockSpec((1, D), resident),            # fc2 bias
        ],
        out_specs=pl.BlockSpec((tm, D), lambda i: (i, 0)),
        out_shape=jax.ShapeDtypeStruct((n_pad, D), x.dtype),
        compiler_params=pltpu.CompilerParams(dimension_semantics=("parallel",)),
    )(x2,
      gamma.reshape(1, D), beta.reshape(1, D),
      w1, b1.reshape(1, d_ff),
      w2, b2.reshape(1, D))

    return out[:N].reshape(orig_shape)


# ---------------------------------------------------------------------------
# Pure-JAX reference (same math, no Pallas) for a sanity check
# ---------------------------------------------------------------------------
def feed_forward_reference(x, gamma, beta, w1, b1, w2, b2):
    mean = jnp.mean(x, axis=-1, keepdims=True)
    var = jnp.mean((x - mean) ** 2, axis=-1, keepdims=True)
    h = (x - mean) / jnp.sqrt(var + EPS) * gamma + beta
    h = jnp.maximum(h @ w1 + b1, 0.0)
    return h @ w2 + b2


if __name__ == "__main__":
    D_MODEL, D_FF = 32, 64
    B, T = 2, 8

    key = jax.random.PRNGKey(0)
    kx, kg, kb, k1, k2, k3, k4 = jax.random.split(key, 7)
    x = jax.random.normal(kx, (B, T, D_MODEL), jnp.float32)
    gamma = 1.0 + 0.1 * jax.random.normal(kg, (D_MODEL,), jnp.float32)
    beta = 0.1 * jax.random.normal(kb, (D_MODEL,), jnp.float32)
    w1 = jax.random.normal(k1, (D_MODEL, D_FF), jnp.float32) / math.sqrt(D_MODEL)
    b1 = 0.01 * jax.random.normal(k2, (D_FF,), jnp.float32)
    w2 = jax.random.normal(k3, (D_FF, D_MODEL), jnp.float32) / math.sqrt(D_FF)
    b2 = 0.01 * jax.random.normal(k4, (D_MODEL,), jnp.float32)

    out = feed_forward(x, gamma, beta, w1, b1, w2, b2)
    out = jax.block_until_ready(out)

    ref = feed_forward_reference(x, gamma, beta, w1, b1, w2, b2)
    assert out.shape == (B, T, D_MODEL)
    assert bool(jnp.all(jnp.isfinite(out)))
    assert bool(jnp.allclose(out, ref, atol=1e-4, rtol=1e-4))
    print("KERNEL_OK")
</pallas_src>

<mosaic_0001>
module attributes {stable_mosaic.version = 11 : i64} {
  func.func @ffn_kernel(%arg0: i32, %arg1: memref<8x32xf32, #tpu.memory_space<vmem>>, %arg2: memref<1x32xf32, #tpu.memory_space<vmem>>, %arg3: memref<1x32xf32, #tpu.memory_space<vmem>>, %arg4: memref<32x64xf32, #tpu.memory_space<vmem>>, %arg5: memref<1x64xf32, #tpu.memory_space<vmem>>, %arg6: memref<64x32xf32, #tpu.memory_space<vmem>>, %arg7: memref<1x32xf32, #tpu.memory_space<vmem>>, %arg8: memref<8x32xf32, #tpu.memory_space<vmem>>) attributes {dimension_semantics = [#tpu.dimension_semantics<parallel>], iteration_bounds = array<i64: 2>, scalar_prefetch = 0 : i64, scratch_operands = 0 : i64, tpu.core_type = #tpu.core_type<tc>, window_params = [{transform_indices = @transform_0, window_bounds = array<i64: 8, 32>}, {pipeline_mode = #tpu.pipeline_mode<synchronous>, transform_indices = @transform_1, window_bounds = array<i64: 1, 32>}, {pipeline_mode = #tpu.pipeline_mode<synchronous>, transform_indices = @transform_2, window_bounds = array<i64: 1, 32>}, {pipeline_mode = #tpu.pipeline_mode<synchronous>, transform_indices = @transform_3, window_bounds = array<i64: 32, 64>}, {pipeline_mode = #tpu.pipeline_mode<synchronous>, transform_indices = @transform_4, window_bounds = array<i64: 1, 64>}, {pipeline_mode = #tpu.pipeline_mode<synchronous>, transform_indices = @transform_5, window_bounds = array<i64: 64, 32>}, {pipeline_mode = #tpu.pipeline_mode<synchronous>, transform_indices = @transform_6, window_bounds = array<i64: 1, 32>}, {transform_indices = @transform_7, window_bounds = array<i64: 8, 32>}]} {
    %c0 = arith.constant 0 : index
    %c0_0 = arith.constant 0 : index
    %0 = vector.load %arg1[%c0, %c0_0] : memref<8x32xf32, #tpu.memory_space<vmem>>, vector<8x32xf32>
    %cst = arith.constant dense<0.000000e+00> : vector<8xf32>
    %1 = vector.multi_reduction <add>, %0, %cst [1] : vector<8x32xf32> to vector<8xf32>
    %2 = vector.shape_cast %1 : vector<8xf32> to vector<8x1xf32>
    %cst_1 = arith.constant 3.200000e+01 : f32
    %3 = vector.broadcast %cst_1 : f32 to vector<8x1xf32>
    %4 = arith.divf %2, %3 : vector<8x1xf32>
    %5 = vector.broadcast %4 : vector<8x1xf32> to vector<8x32xf32>
    %6 = arith.subf %0, %5 : vector<8x32xf32>
    %7 = arith.mulf %6, %6 : vector<8x32xf32>
    %cst_2 = arith.constant dense<0.000000e+00> : vector<8xf32>
    %8 = vector.multi_reduction <add>, %7, %cst_2 [1] : vector<8x32xf32> to vector<8xf32>
    %9 = vector.shape_cast %8 : vector<8xf32> to vector<8x1xf32>
    %cst_3 = arith.constant 3.200000e+01 : f32
    %10 = vector.broadcast %cst_3 : f32 to vector<8x1xf32>
    %11 = arith.divf %9, %10 : vector<8x1xf32>
    %cst_4 = arith.constant 9.99999974E-6 : f32
    %12 = vector.broadcast %cst_4 : f32 to vector<8x1xf32>
    %13 = arith.addf %11, %12 : vector<8x1xf32>
    %14 = math.rsqrt %13 : vector<8x1xf32>
    %15 = vector.broadcast %14 : vector<8x1xf32> to vector<8x32xf32>
    %16 = arith.mulf %6, %15 : vector<8x32xf32>
    %c0_5 = arith.constant 0 : index
    %c0_6 = arith.constant 0 : index
    %17 = vector.load %arg2[%c0_5, %c0_6] : memref<1x32xf32, #tpu.memory_space<vmem>>, vector<1x32xf32>
    %18 = vector.broadcast %17 : vector<1x32xf32> to vector<8x32xf32>
    %19 = arith.mulf %16, %18 : vector<8x32xf32>
    %c0_7 = arith.constant 0 : index
    %c0_8 = arith.constant 0 : index
    %20 = vector.load %arg3[%c0_7, %c0_8] : memref<1x32xf32, #tpu.memory_space<vmem>>, vector<1x32xf32>
    %21 = vector.broadcast %20 : vector<1x32xf32> to vector<8x32xf32>
    %22 = arith.addf %19, %21 : vector<8x32xf32>
    %c0_9 = arith.constant 0 : index
    %c0_10 = arith.constant 0 : index
    %23 = vector.load %arg4[%c0_9, %c0_10] : memref<32x64xf32, #tpu.memory_space<vmem>>, vector<32x64xf32>
    %cst_11 = arith.constant dense<0.000000e+00> : vector<8x64xf32>
    %24 = tpu.matmul %22, %23, %cst_11 {dimension_numbers = #tpu.dot_dimension_numbers<[1], [0], [0], [1], [0, 0, 1, 1], [], []>} : vector<8x32xf32>, vector<32x64xf32>, vector<8x64xf32> -> vector<8x64xf32>
    %c0_12 = arith.constant 0 : index
    %c0_13 = arith.constant 0 : index
    %25 = vector.load %arg5[%c0_12, %c0_13] : memref<1x64xf32, #tpu.memory_space<vmem>>, vector<1x64xf32>
    %26 = vector.broadcast %25 : vector<1x64xf32> to vector<8x64xf32>
    %27 = arith.addf %24, %26 : vector<8x64xf32>
    %cst_14 = arith.constant 0.000000e+00 : f32
    %28 = vector.broadcast %cst_14 : f32 to vector<8x64xf32>
    %29 = arith.maximumf %27, %28 : vector<8x64xf32>
    %c0_15 = arith.constant 0 : index
    %c0_16 = arith.constant 0 : index
    %30 = vector.load %arg6[%c0_15, %c0_16] : memref<64x32xf32, #tpu.memory_space<vmem>>, vector<64x32xf32>
    %cst_17 = arith.constant dense<0.000000e+00> : vector<8x32xf32>
    %31 = tpu.matmul %29, %30, %cst_17 {dimension_numbers = #tpu.dot_dimension_numbers<[1], [0], [0], [1], [0, 0, 1, 1], [], []>} : vector<8x64xf32>, vector<64x32xf32>, vector<8x32xf32> -> vector<8x32xf32>
    %c0_18 = arith.constant 0 : index
    %c0_19 = arith.constant 0 : index
    %32 = vector.load %arg7[%c0_18, %c0_19] : memref<1x32xf32, #tpu.memory_space<vmem>>, vector<1x32xf32>
    %33 = vector.broadcast %32 : vector<1x32xf32> to vector<8x32xf32>
    %34 = arith.addf %31, %33 : vector<8x32xf32>
    %c0_20 = arith.constant 0 : index
    %c0_21 = arith.constant 0 : index
    %35 = vector.load %arg8[%c0_20, %c0_21] : memref<8x32xf32, #tpu.memory_space<vmem>>, vector<8x32xf32>
    tpu.vector_store %arg8[%c0_20, %c0_21], %34 {strides = array<i32>} : memref<8x32xf32, #tpu.memory_space<vmem>>, vector<8x32xf32>,
    return
  }
  func.func @transform_0(%arg0: i32) -> (i32, i32) {
    %c0_i32 = arith.constant 0 : i32
    %c0_i32_0 = arith.constant 0 : i32
    return %arg0, %c0_i32 : i32, i32
  }
  func.func @transform_1(%arg0: i32) -> (i32, i32) {
    %c0_i32 = arith.constant 0 : i32
    %c0_i32_0 = arith.constant 0 : i32
    %c0_i32_1 = arith.constant 0 : i32
    return %c0_i32, %c0_i32_0 : i32, i32
  }
  func.func @transform_2(%arg0: i32) -> (i32, i32) {
    %c0_i32 = arith.constant 0 : i32
    %c0_i32_0 = arith.constant 0 : i32
    %c0_i32_1 = arith.constant 0 : i32
    return %c0_i32, %c0_i32_0 : i32, i32
  }
  func.func @transform_3(%arg0: i32) -> (i32, i32) {
    %c0_i32 = arith.constant 0 : i32
    %c0_i32_0 = arith.constant 0 : i32
    %c0_i32_1 = arith.constant 0 : i32
    return %c0_i32, %c0_i32_0 : i32, i32
  }
  func.func @transform_4(%arg0: i32) -> (i32, i32) {
    %c0_i32 = arith.constant 0 : i32
    %c0_i32_0 = arith.constant 0 : i32
    %c0_i32_1 = arith.constant 0 : i32
    return %c0_i32, %c0_i32_0 : i32, i32
  }
  func.func @transform_5(%arg0: i32) -> (i32, i32) {
    %c0_i32 = arith.constant 0 : i32
    %c0_i32_0 = arith.constant 0 : i32
    %c0_i32_1 = arith.constant 0 : i32
    return %c0_i32, %c0_i32_0 : i32, i32
  }
  func.func @transform_6(%arg0: i32) -> (i32, i32) {
    %c0_i32 = arith.constant 0 : i32
    %c0_i32_0 = arith.constant 0 : i32
    %c0_i32_1 = arith.constant 0 : i32
    return %c0_i32, %c0_i32_0 : i32, i32
  }
  func.func @transform_7(%arg0: i32) -> (i32, i32) {
    %c0_i32 = arith.constant 0 : i32
    %c0_i32_0 = arith.constant 0 : i32
    return %arg0, %c0_i32 : i32, i32
  }
}

</mosaic_0001>

<llo_original>
// kernel: tpu_custom_call.1
$region0: #{tpu_custom_call.1}
  #allocation0 [shape = 'u32[]', space=smem, size = 0x4, offset = 0x4, fixed_abs, tag = 'smem constant byte address 0x4 - core index']
  #allocation1 [shape = 'u32[144,128]{1,0:T(1,128)}', space=vmem, size = 0x12000, scoped, tag = 'internal scratch']
  %s0 = inlined_call_operand.vmem [shape: f32[16,32], index: 0, kind: input, shape index: {}]
  %s1 = inlined_call_operand.vmem [shape: f32[1,32], index: 1, kind: input, shape index: {}]
  %s2 = inlined_call_operand.vmem [shape: f32[1,32], index: 2, kind: input, shape index: {}]
  %s3 = inlined_call_operand.vmem [shape: f32[32,64], index: 3, kind: input, shape index: {}]
  %s4 = inlined_call_operand.vmem [shape: f32[1,64], index: 4, kind: input, shape index: {}]
  %s5 = inlined_call_operand.vmem [shape: f32[64,32], index: 5, kind: input, shape index: {}]
  %s6 = inlined_call_operand.vmem [shape: f32[1,32], index: 6, kind: input, shape index: {}]
  %s7 = inlined_call_operand.hbm [shape: f32[16,32], index: 7, kind: output, shape index: {}]
  %s8 = sld [smem:[#allocation0]]
  $region61: #{tpu_custom_call.1} parent=0
    _
  %s10 = ssub.s32 1, %s8
  %s11 = scalar_select 0, %s10, %s8
  $region1: #{tpu_custom_call.1} parent=0
    #allocation2 [shape = 'u8[8192]{0}', space=vmem, size = 0x2000, scoped, tag = 'output window, operand 0']
    #allocation3 [shape = 's32[2]{0}', space=sflag, size = 0x8, scoped, tag = 'scoped memory for tpu_custom_call.1']
    %12 = vsyncpa [#allocation3], 0
    %s13 = scalar_lea.sflag [#allocation3], 1
    %14 = vsyncpa %s13, 0
    loop: start=0, step=1, limit=4
    $region2: #{tpu_custom_call.1} parent=1 // loop_pre_header
      _
    $region3: #{tpu_custom_call.1} parent=1 // loop_header
      %s16 = sphi 0, %s20
      %p17 = scmp.ge.s32.totalorder %s16, 4
      %s26 = sphi 0, %s28
      %s29 = sphi 0, %s26
      %s30 = sphi 0, %s29
      %s46 = sphi 0, %s30
      %s50 = sphi 0, %s50
      %s52 = sphi 0, %s50
      %s53 = sphi 0, %s52
      %s67 = sphi 0, %s53
      %s71 = sphi 0, %s71
      %s73 = sphi 0, %s71
      %s74 = sphi 0, %s73
      %s88 = sphi 0, %s74
      %s92 = sphi 0, %s92
      %s94 = sphi 0, %s92
      %s95 = sphi 0, %s94
      %s109 = sphi 0, %s95
      %s113 = sphi 0, %s113
      %s115 = sphi 0, %s113
      %s116 = sphi 0, %s115
      %s130 = sphi 0, %s116
      %s134 = sphi 0, %s134
      %s136 = sphi 0, %s134
      %s137 = sphi 0, %s136
      %s151 = sphi 0, %s137
      %s155 = sphi 0, %s155
      %s157 = sphi 0, %s155
      %s158 = sphi 0, %s157
      %s172 = sphi 0, %s158
      %s178 = sphi 0, %s180
      %s181 = sphi 0, %s178
      %s182 = sphi 0, %s181
      %s198 = sphi 0, %s182
    $region4: #{tpu_custom_call.1} parent=1 // loop_header_branch
      %19 = sbr.rel (%p17) target = $region8
    $region5: #{tpu_custom_call.1} parent=1 // loop_body
      %s21 = ssub.s32 %s16, 1
      %s22 = ssub.s32 %s16, 2
      %s23 = sadd.s32 %s16, 1
      %s24 = ssub.s32 %s16, %s23
      %p25 = scmp.eq.s32.totalorder %s24, 0
      %s27 = sadd.s32 %s26, 1
      %s28 = scalar_select %p25, %s26, %s27
      %p31 = pneg %p25
      %p32 = scmp.eq.s32.totalorder %s16, 1
      %p33 = por %p31, %p32
      %p34 = scmp.ne.s32.totalorder %s26, %s29
      %p35 = scmp.eq.s32.totalorder %s16, 0
      %p36 = por %p34, %p35
      %p37 = scmp.ne.s32.totalorder %s26, %s29
      %p38 = scmp.eq.s32.totalorder %s21, 1
      %p39 = por %p37, %p38
      %p40 = scmp.ne.s32.totalorder %s29, %s30
      %p41 = scmp.eq.s32.totalorder %s21, 0
      %p42 = por %p40, %p41
      %p43 = scmp.ne.s32.totalorder %s29, %s30
      %p44 = scmp.eq.s32.totalorder %s22, 1
      %p45 = por %p43, %p44
      %p47 = scmp.ne.s32.totalorder %s30, %s46
      %p48 = scmp.eq.s32.totalorder %s22, 0
      %p49 = por %p47, %p48
      %s51 = sadd.s32 %s50, 1
      %p54 = scmp.eq.s32.totalorder %s16, 1
      %p55 = scmp.ne.s32.totalorder %s50, %s52
      %p56 = scmp.eq.s32.totalorder %s16, 0
      %p57 = por %p55, %p56
      %p58 = scmp.ne.s32.totalorder %s50, %s52
      %p59 = scmp.eq.s32.totalorder %s21, 1
      %p60 = por %p58, %p59
      %p61 = scmp.ne.s32.totalorder %s52, %s53
      %p62 = scmp.eq.s32.totalorder %s21, 0
      %p63 = por %p61, %p62
      %p64 = scmp.ne.s32.totalorder %s52, %s53
      %p65 = scmp.eq.s32.totalorder %s22, 1
      %p66 = por %p64, %p65
      %p68 = scmp.ne.s32.totalorder %s53, %s67
      %p69 = scmp.eq.s32.totalorder %s22, 0
      %p70 = por %p68, %p69
      %s72 = sadd.s32 %s71, 1
      %p75 = scmp.eq.s32.totalorder %s16, 1
      %p76 = scmp.ne.s32.totalorder %s71, %s73
      %p77 = scmp.eq.s32.totalorder %s16, 0
      %p78 = por %p76, %p77
      %p79 = scmp.ne.s32.totalorder %s71, %s73
      %p80 = scmp.eq.s32.totalorder %s21, 1
      %p81 = por %p79, %p80
      %p82 = scmp.ne.s32.totalorder %s73, %s74
      %p83 = scmp.eq.s32.totalorder %s21, 0
      %p84 = por %p82, %p83
      %p85 = scmp.ne.s32.totalorder %s73, %s74
      %p86 = scmp.eq.s32.totalorder %s22, 1
      %p87 = por %p85, %p86
      %p89 = scmp.ne.s32.totalorder %s74, %s88
      %p90 = scmp.eq.s32.totalorder %s22, 0
      %p91 = por %p89, %p90
      %s93 = sadd.s32 %s92, 1
      %p96 = scmp.eq.s32.totalorder %s16, 1
      %p97 = scmp.ne.s32.totalorder %s92, %s94
      %p98 = scmp.eq.s32.totalorder %s16, 0
      %p99 = por %p97, %p98
      %p100 = scmp.ne.s32.totalorder %s92, %s94
      %p101 = scmp.eq.s32.totalorder %s21, 1
      %p102 = por %p100, %p101
      %p103 = scmp.ne.s32.totalorder %s94, %s95
      %p104 = scmp.eq.s32.totalorder %s21, 0
      %p105 = por %p103, %p104
      %p106 = scmp.ne.s32.totalorder %s94, %s95
      %p107 = scmp.eq.s32.totalorder %s22, 1
      %p108 = por %p106, %p107
      %p110 = scmp.ne.s32.totalorder %s95, %s109
      %p111 = scmp.eq.s32.totalorder %s22, 0
      %p112 = por %p110, %p111
      %s114 = sadd.s32 %s113, 1
      %p117 = scmp.eq.s32.totalorder %s16, 1
      %p118 = scmp.ne.s32.totalorder %s113, %s115
      %p119 = scmp.eq.s32.totalorder %s16, 0
      %p120 = por %p118, %p119
      %p121 = scmp.ne.s32.totalorder %s113, %s115
      %p122 = scmp.eq.s32.totalorder %s21, 1
      %p123 = por %p121, %p122
      %p124 = scmp.ne.s32.totalorder %s115, %s116
      %p125 = scmp.eq.s32.totalorder %s21, 0
      %p126 = por %p124, %p125
      %p127 = scmp.ne.s32.totalorder %s115, %s116
      %p128 = scmp.eq.s32.totalorder %s22, 1
      %p129 = por %p127, %p128
      %p131 = scmp.ne.s32.totalorder %s116, %s130
      %p132 = scmp.eq.s32.totalorder %s22, 0
      %p133 = por %p131, %p132
      %s135 = sadd.s32 %s134, 1
      %p138 = scmp.eq.s32.totalorder %s16, 1
      %p139 = scmp.ne.s32.totalorder %s134, %s136
      %p140 = scmp.eq.s32.totalorder %s16, 0
      %p141 = por %p139, %p140
      %p142 = scmp.ne.s32.totalorder %s134, %s136
      %p143 = scmp.eq.s32.totalorder %s21, 1
      %p144 = por %p142, %p143
      %p145 = scmp.ne.s32.totalorder %s136, %s137
      %p146 = scmp.eq.s32.totalorder %s21, 0
      %p147 = por %p145, %p146
      %p148 = scmp.ne.s32.totalorder %s136, %s137
      %p149 = scmp.eq.s32.totalorder %s22, 1
      %p150 = por %p148, %p149
      %p152 = scmp.ne.s32.totalorder %s137, %s151
      %p153 = scmp.eq.s32.totalorder %s22, 0
      %p154 = por %p152, %p153
      %s156 = sadd.s32 %s155, 1
      %p159 = scmp.eq.s32.totalorder %s16, 1
      %p160 = scmp.ne.s32.totalorder %s155, %s157
      %p161 = scmp.eq.s32.totalorder %s16, 0
      %p162 = por %p160, %p161
      %p163 = scmp.ne.s32.totalorder %s155, %s157
      %p164 = scmp.eq.s32.totalorder %s21, 1
      %p165 = por %p163, %p164
      %p166 = scmp.ne.s32.totalorder %s157, %s158
      %p167 = scmp.eq.s32.totalorder %s21, 0
      %p168 = por %p166, %p167
      %p169 = scmp.ne.s32.totalorder %s157, %s158
      %p170 = scmp.eq.s32.totalorder %s22, 1
      %p171 = por %p169, %p170
      %p173 = scmp.ne.s32.totalorder %s158, %s172
      %p174 = scmp.eq.s32.totalorder %s22, 0
      %p175 = por %p173, %p174
      %s176 = ssub.s32 %s16, %s23
      %p177 = scmp.eq.s32.totalorder %s176, 0
      %s179 = sadd.s32 %s178, 1
      %s180 = scalar_select %p177, %s178, %s179
      %p183 = pneg %p177
      %p184 = scmp.eq.s32.totalorder %s16, 1
      %p185 = por %p183, %p184
      %p186 = scmp.ne.s32.totalorder %s178, %s181
      %p187 = scmp.eq.s32.totalorder %s16, 0
      %p188 = por %p186, %p187
      %p189 = scmp.ne.s32.totalorder %s178, %s181
      %p190 = scmp.eq.s32.totalorder %s21, 1
      %p191 = por %p189, %p190
      %p192 = scmp.ne.s32.totalorder %s181, %s182
      %p193 = scmp.eq.s32.totalorder %s21, 0
      %p194 = por %p192, %p193
      %p195 = scmp.ne.s32.totalorder %s181, %s182
      %p196 = scmp.eq.s32.totalorder %s22, 1
      %p197 = por %p195, %p196
      %p199 = scmp.ne.s32.totalorder %s182, %s198
      %p200 = scmp.eq.s32.totalorder %s22, 0
      %p201 = por %p199, %p200
      %p202 = scmp.le.s32.totalorder 1, %s16
      %p203 = scmp.lt.s32.totalorder %s16, 3
      %p204 = pnand %p202, %p203
      %p205 = pneg %p204
      // Predicated region
      $region9: #{tpu_custom_call.1} parent=5 // pred_check
        _
      $region10: #{tpu_custom_call.1} parent=5 // pred_check_branch
        %207 = sbr.rel (%p204) target = $region12
      $region11: #{tpu_custom_call.1} parent=5 // pred_region
        %s208 = ssub.s32 %s16, 1
        // Predicated region
        $region13: #{tpu_custom_call.1} parent=11 // pred_check
          %p209 = pneg %p63
        $region14: #{tpu_custom_call.1} parent=11 // pred_check_branch
          %211 = sbr.rel (%p209) target = $region16
        $region15: #{tpu_custom_call.1} parent=11 // pred_region
          _
        $region16: #{tpu_custom_call.1} parent=11 // pred_fallthru
          _
        // Predicated region
        $region17: #{tpu_custom_call.1} parent=11 // pred_check
          %p212 = pneg %p84
        $region18: #{tpu_custom_call.1} parent=11 // pred_check_branch
          %214 = sbr.rel (%p212) target = $region20
        $region19: #{tpu_custom_call.1} parent=11 // pred_region
          _
        $region20: #{tpu_custom_call.1} parent=11 // pred_fallthru
          _
        // Predicated region
        $region21: #{tpu_custom_call.1} parent=11 // pred_check
          %p215 = pneg %p105
        $region22: #{tpu_custom_call.1} parent=11 // pred_check_branch
          %217 = sbr.rel (%p215) target = $region24
        $region23: #{tpu_custom_call.1} parent=11 // pred_region
          _
        $region24: #{tpu_custom_call.1} parent=11 // pred_fallthru
          _
        // Predicated region
        $region25: #{tpu_custom_call.1} parent=11 // pred_check
          %p218 = pneg %p126
        $region26: #{tpu_custom_call.1} parent=11 // pred_check_branch
          %220 = sbr.rel (%p218) target = $region28
        $region27: #{tpu_custom_call.1} parent=11 // pred_region
          _
        $region28: #{tpu_custom_call.1} parent=11 // pred_fallthru
          _
        // Predicated region
        $region29: #{tpu_custom_call.1} parent=11 // pred_check
          %p221 = pneg %p147
        $region30: #{tpu_custom_call.1} parent=11 // pred_check_branch
          %223 = sbr.rel (%p221) target = $region32
        $region31: #{tpu_custom_call.1} parent=11 // pred_region
          _
        $region32: #{tpu_custom_call.1} parent=11 // pred_fallthru
          _
        // Predicated region
        $region33: #{tpu_custom_call.1} parent=11 // pred_check
          %p224 = pneg %p168
        $region34: #{tpu_custom_call.1} parent=11 // pred_check_branch
          %226 = sbr.rel (%p224) target = $region36
        $region35: #{tpu_custom_call.1} parent=11 // pred_region
          _
        $region36: #{tpu_custom_call.1} parent=11 // pred_fallthru
          _
      $region12: #{tpu_custom_call.1} parent=5 // pred_fallthru
        _
      %p227 = scmp.lt.s32.totalorder %s16, 2
      // Predicated region
      $region37: #{tpu_custom_call.1} parent=5 // pred_check
        %p228 = pneg %p227
      $region38: #{tpu_custom_call.1} parent=5 // pred_check_branch
        %230 = sbr.rel (%p228) target = $region40
      $region39: #{tpu_custom_call.1} parent=5 // pred_region
        // Predicated region
        $region41: #{tpu_custom_call.1} parent=39 // pred_check
          %p231 = pneg %p36
        $region42: #{tpu_custom_call.1} parent=39 // pred_check_branch
          %233 = sbr.rel (%p231) target = $region44
        $region43: #{tpu_custom_call.1} parent=39 // pred_region
          %p234 = scmp.lt.s32.totalorder %s16, 1
          %s235 = scalar_select %p234, %s16, 1
          %s236 = smul.addr %s235, 8
          %s237 = scalar_lea.vmem %s0, %s236
        $region44: #{tpu_custom_call.1} parent=39 // pred_fallthru
          _
      $region40: #{tpu_custom_call.1} parent=5 // pred_fallthru
        _
      %p238 = scmp.le.s32.totalorder 1, %s16
      %p239 = scmp.lt.s32.totalorder %s16, 3
      %p240 = pnand %p238, %p239
      %p241 = pneg %p240
      // Predicated region
      $region45: #{tpu_custom_call.1} parent=5 // pred_check
        _
      $region46: #{tpu_custom_call.1} parent=5 // pred_check_branch
        %243 = sbr.rel (%p240) target = $region48
      $region47: #{tpu_custom_call.1} parent=5 // pred_region
        %s244 = ssub.s32 %s16, 1
        %p245 = scmp.lt.s32.totalorder %s21, 1
        %s246 = scalar_select %p245, %s21, 1
        %s247 = smul.addr %s246, 8
        %s248 = scalar_lea.vmem %s0, %s247
        %p249 = pneg %p42
        %p250 = pneg %p39
        %p251 = pneg %p63
        %p252 = pneg %p60
        %p253 = pneg %p84
        %p254 = pneg %p81
        %p255 = pneg %p105
        %p256 = pneg %p102
        %p257 = pneg %p126
        %p258 = pneg %p123
        %p259 = pneg %p147
        %p260 = pneg %p144
        %p261 = pneg %p168
        %p262 = pneg %p165
        %p263 = pneg %p194
        %p264 = pneg %p191
        %s265 = sand.u32 %s181, 1
        %s266 = scalar_lea.sflag [#allocation3], %s265
        %s267 = sand.u32 %s181, 1
        %s268 = smul.addr %s267, 8
        %s269 = scalar_lea.vmem [#allocation2], %s268
        %p270 = scmp.lt.s32.totalorder %s21, 1
        %s271 = scalar_select %p270, %s21, 1
        %s272 = smul.addr %s271, 8
        %s273 = scalar_lea.vmem %s0, %s272
        %v274 = vld [vmem:[%s273] sm:$0xff]
        %vm275 = vcmask 261120
        %v276 = vsel %vm275, %v274, 0.0
        %277 = vadd.xlane.f32.xlu0 %v276
        %v278 = vpop.xlane.xlu0 %277
        %v279 = vrcp.pop 32.0
        %v280 = vmul.f32 %v278, %v279
        %v281 = vsub.f32 %v274, %v280
        %v282 = vmul.f32 %v281, %v281
        %v283 = vsel %vm275, %v282, 0.0
        %284 = vadd.xlane.f32.xlu0 %v283
        %v285 = vpop.xlane.xlu0 %284
        %v286 = vmul.f32 %v285, %v279
        %v287 = vadd.f32 %v286, 1e-05
        %v288 = vrsqrt.pop %v287
        %v289 = vmul.f32 %v281, %v288
        %v290 = vld [vmem:[%s1] sm:$0x1]
        %v292 = vlaneseq
        %v293 = vshrl.u32 %v292, 7
        %v294 = vsub.s32 0, %v293
        %v295 = vrot.slane %v290, %v294
        %v297 = vmul.f32 %v289, %v295
        %v298 = vld [vmem:[%s2] sm:$0x1]
        %v300 = vlaneseq
        %v301 = vshrl.u32 %v300, 7
        %v302 = vsub.s32 0, %v301
        %v303 = vrot.slane %v298, %v302
        %v305 = vadd.f32 %v297, %v303
        %v306 = vld [vmem:[%s3] sm:$0xff]
        %v307 = vld [vmem:[%s3 + $0x8] sm:$0xff]
        %v308 = vld [vmem:[%s3 + $0x10] sm:$0xff]
        %v309 = vld [vmem:[%s3 + $0x18] sm:$0xff]
        %v310 = vld [vmem:[%s4] sm:$0x1]
        %v312 = vlaneseq
        %v313 = vshrl.u32 %v312, 7
        %v314 = vsub.s32 0, %v313
        %v315 = vrot.slane %v310, %v314
        %v318 = vsel %vm275, %v305, 0
        %320 = vmatprep.subr.mxu0 0.0
        %321 = vmatpush1.msra.mxu0 %v306
        %322 = vmatprep.subr.mxu0 0.0
        %323 = vmatpush1.msra.mxu0 %v307
        %324 = vmatprep.subr.mxu0 0.0
        %325 = vmatpush1.msra.mxu0 %v308
        %326 = vmatprep.subr.mxu0 0.0
        %327 = vmatpush1.msra.mxu0 %v309
        %328 = vmatprep.subr.mxu0 0.0
        %329 = vmatpush1.msra.mxu0 0.0
        %330 = vmatprep.subr.mxu0 0.0
        %331 = vmatpush1.msra.mxu0 0.0
        %332 = vmatprep.subr.mxu0 0.0
        %333 = vmatpush1.msra.mxu0 0.0
        %334 = vmatprep.subr.mxu0 0.0
        %335 = vmatpush1.msra.mxu0 0.0
        %336 = vmatprep.subr.mxu0 0.0
        %337 = vmatpush1.msra.mxu0 0.0
        %338 = vmatprep.subr.mxu0 0.0
        %339 = vmatpush1.msra.mxu0 0.0
        %340 = vmatprep.subr.mxu0 0.0
        %341 = vmatpush1.msra.mxu0 0.0
        %342 = vmatprep.subr.mxu0 0.0
        %343 = vmatpush1.msra.mxu0 0.0
        %344 = vmatprep.subr.mxu0 0.0
        %345 = vmatpush1.msra.mxu0 0.0
        %346 = vmatprep.subr.mxu0 0.0
        %347 = vmatpush1.msra.mxu0 0.0
        %348 = vmatprep.subr.mxu0 0.0
        %349 = vmatpush1.msra.mxu0 0.0
        %350 = vmatprep.subr.mxu0 0.0
        %351 = vmatpush1.msra.mxu0 0.0
        %352 = vmatprep.subr.mxu0 0.0
        %353 = vmatpush1.msra.mxu0 0.0
        %354 = vmatprep.subr.mxu0 0.0
        %355 = vmatpush1.msra.mxu0 0.0
        %356 = vmatprep.subr.mxu0 0.0
        %357 = vmatpush1.msra.mxu0 0.0
        %358 = vmatprep.subr.mxu0 0.0
        %359 = vmatpush1.msra.mxu0 0.0
        %360 = vmatprep.subr.mxu0 0.0
        %361 = vmatpush1.msra.mxu0 0.0
        %362 = vmatprep.subr.mxu0 0.0
        %363 = vmatpush1.msra.mxu0 0.0
        %364 = vmatprep.subr.mxu0 0.0
        %365 = vmatpush1.msra.mxu0 0.0
        %366 = vmatprep.subr.mxu0 0.0
        %367 = vmatpush1.msra.mxu0 0.0
        %368 = vmatprep.subr.mxu0 0.0
        %369 = vmatpush1.msra.mxu0 0.0
        %370 = vmatprep.subr.mxu0 0.0
        %371 = vmatpush1.msra.mxu0 0.0
        %372 = vmatprep.subr.mxu0 0.0
        %373 = vmatpush1.msra.mxu0 0.0
        %374 = vmatprep.subr.mxu0 0.0
        %375 = vmatpush1.msra.mxu0 0.0
        %376 = vmatprep.subr.mxu0 0.0
        %377 = vmatpush1.msra.mxu0 0.0
        %378 = vmatprep.subr.mxu0 0.0
        %379 = vmatpush1.msra.mxu0 0.0
        %380 = vmatprep.subr.mxu0 0.0
        %381 = vmatpush1.msra.mxu0 0.0
        %382 = vmatprep.subr.mxu0 0.0
        %383 = vmatpush1.msra.mxu0 0.0
        %384 = vmatprep.mubr.f32.mxu0 0.0
        %385 = vmatmul.mubr.f32.gmra.mrb[0].mxu0 %v318
        %v386 = vpop.f32.mrb[0].mxu0
        %v387 = vadd.f32 %v315, %v386
        %v388 = vpop.f32.mrb[0].mxu0
        %389 = vdwg.mxu0
        %v390 = vmax.f32 %v387, 0.0
        %v391 = vld [vmem:[%s5] sm:$0xff]
        %v392 = vld [vmem:[%s5 + $0x8] sm:$0xff]
        %v393 = vld [vmem:[%s5 + $0x10] sm:$0xff]
        %v394 = vld [vmem:[%s5 + $0x18] sm:$0xff]
        %v395 = vld [vmem:[%s5 + $0x20] sm:$0xff]
        %v396 = vld [vmem:[%s5 + $0x28] sm:$0xff]
        %v397 = vld [vmem:[%s5 + $0x30] sm:$0xff]
        %v398 = vld [vmem:[%s5 + $0x38] sm:$0xff]
        %v399 = vld [vmem:[%s6] sm:$0x1]
        %v401 = vlaneseq
        %v402 = vshrl.u32 %v401, 7
        %v403 = vsub.s32 0, %v402
        %v404 = vrot.slane %v399, %v403
        %vm406 = vcmask 523264
        %v408 = vsel %vm406, %v390, 0
        %410 = vmatprep.subr.mxu0 0.0
        %411 = vmatpush1.msra.mxu0 %v391
        %412 = vmatprep.subr.mxu0 0.0
        %413 = vmatpush1.msra.mxu0 %v392
        %414 = vmatprep.subr.mxu0 0.0
        %415 = vmatpush1.msra.mxu0 %v393
        %416 = vmatprep.subr.mxu0 0.0
        %417 = vmatpush1.msra.mxu0 %v394
        %418 = vmatprep.subr.mxu0 0.0
        %419 = vmatpush1.msra.mxu0 %v395
        %420 = vmatprep.subr.mxu0 0.0
        %421 = vmatpush1.msra.mxu0 %v396
        %422 = vmatprep.subr.mxu0 0.0
        %423 = vmatpush1.msra.mxu0 %v397
        %424 = vmatprep.subr.mxu0 0.0
        %425 = vmatpush1.msra.mxu0 %v398
        %426 = vmatprep.subr.mxu0 0.0
        %427 = vmatpush1.msra.mxu0 0.0
        %428 = vmatprep.subr.mxu0 0.0
        %429 = vmatpush1.msra.mxu0 0.0
        %430 = vmatprep.subr.mxu0 0.0
        %431 = vmatpush1.msra.mxu0 0.0
        %432 = vmatprep.subr.mxu0 0.0
        %433 = vmatpush1.msra.mxu0 0.0
        %434 = vmatprep.subr.mxu0 0.0
        %435 = vmatpush1.msra.mxu0 0.0
        %436 = vmatprep.subr.mxu0 0.0
        %437 = vmatpush1.msra.mxu0 0.0
        %438 = vmatprep.subr.mxu0 0.0
        %439 = vmatpush1.msra.mxu0 0.0
        %440 = vmatprep.subr.mxu0 0.0
        %441 = vmatpush1.msra.mxu0 0.0
        %442 = vmatprep.subr.mxu0 0.0
        %443 = vmatpush1.msra.mxu0 0.0
        %444 = vmatprep.subr.mxu0 0.0
        %445 = vmatpush1.msra.mxu0 0.0
        %446 = vmatprep.subr.mxu0 0.0
        %447 = vmatpush1.msra.mxu0 0.0
        %448 = vmatprep.subr.mxu0 0.0
        %449 = vmatpush1.msra.mxu0 0.0
        %450 = vmatprep.subr.mxu0 0.0
        %451 = vmatpush1.msra.mxu0 0.0
        %452 = vmatprep.subr.mxu0 0.0
        %453 = vmatpush1.msra.mxu0 0.0
        %454 = vmatprep.subr.mxu0 0.0
        %455 = vmatpush1.msra.mxu0 0.0
        %456 = vmatprep.subr.mxu0 0.0
        %457 = vmatpush1.msra.mxu0 0.0
        %458 = vmatprep.subr.mxu0 0.0
        %459 = vmatpush1.msra.mxu0 0.0
        %460 = vmatprep.subr.mxu0 0.0
        %461 = vmatpush1.msra.mxu0 0.0
        %462 = vmatprep.subr.mxu0 0.0
        %463 = vmatpush1.msra.mxu0 0.0
        %464 = vmatprep.subr.mxu0 0.0
        %465 = vmatpush1.msra.mxu0 0.0
        %466 = vmatprep.subr.mxu0 0.0
        %467 = vmatpush1.msra.mxu0 0.0
        %468 = vmatprep.subr.mxu0 0.0
        %469 = vmatpush1.msra.mxu0 0.0
        %470 = vmatprep.subr.mxu0 0.0
        %471 = vmatpush1.msra.mxu0 0.0
        %472 = vmatprep.subr.mxu0 0.0
        %473 = vmatpush1.msra.mxu0 0.0
        %474 = vmatprep.mubr.f32.mxu0 0.0
        %475 = vmatmul.mubr.f32.gmra.mrb[0].mxu0 %v408
        %v476 = vpop.f32.mrb[0].mxu0
        %v477 = vadd.f32 %v404, %v476
        %v478 = vpop.f32.mrb[0].mxu0
        %479 = vdwg.mxu0
        %480 = vst.msk [vmem:[%s269] sm:$0xff] %vm275, %v477
        %s481 = sand.u32 %s181, 1
        %s482 = scalar_lea.sflag [#allocation3], %s481
        %s483 = sand.u32 %s181, 1
        %s484 = smul.addr %s483, 8
        %s485 = scalar_lea.vmem [#allocation2], %s484
        // Predicated region
        $region49: #{tpu_custom_call.1} parent=47 // pred_check
          %p486 = pneg %p191
        $region50: #{tpu_custom_call.1} parent=47 // pred_check_branch
          %488 = sbr.rel (%p486) target = $region52
        $region51: #{tpu_custom_call.1} parent=47 // pred_region
          %s490 = ssub.s32 128, 128
          %491 = vsyncadd %s482, %s490
          %s492 = smul.addr %s21, 128
          %s493 = scalar_lea.hbm %s7, %s492
          %s495 = sshll.u32 %s485, 4
          %s496 = int_to_ptr.vmem [resolvable:$true] %s495
          %498 = dma.vmem_to_hbm [thread:$0]  %s496, 128, %s493, %s482
        $region52: #{tpu_custom_call.1} parent=47 // pred_fallthru
          _
      $region48: #{tpu_custom_call.1} parent=5 // pred_fallthru
        _
      %p499 = scmp.le.s32.totalorder 2, %s16
      // Predicated region
      $region53: #{tpu_custom_call.1} parent=5 // pred_check
        %p500 = pneg %p499
      $region54: #{tpu_custom_call.1} parent=5 // pred_check_branch
        %502 = sbr.rel (%p500) target = $region56
      $region55: #{tpu_custom_call.1} parent=5 // pred_region
        %s503 = ssub.s32 %s16, 2
        // Predicated region
        $region57: #{tpu_custom_call.1} parent=55 // pred_check
          %p504 = pneg %p197
        $region58: #{tpu_custom_call.1} parent=55 // pred_check_branch
          %506 = sbr.rel (%p504) target = $region60
        $region59: #{tpu_custom_call.1} parent=55 // pred_region
          %s507 = sand.u32 %s182, 1
          %s508 = scalar_lea.sflag [#allocation3], %s507
          %s509 = sand.u32 %s182, 1
          %s510 = smul.addr %s509, 8
          %s511 = scalar_lea.vmem [#allocation2], %s510
          %512 = dma.done %s508, 128
        $region60: #{tpu_custom_call.1} parent=55 // pred_fallthru
          _
      $region56: #{tpu_custom_call.1} parent=5 // pred_fallthru
        _
    $region6: #{tpu_custom_call.1} parent=1 // loop_footer
      %s20 = sadd.s32 1, %s16
    $region7: #{tpu_custom_call.1} parent=1 // loop_footer_branch
      %15 = sbr.rel target = $region3
    $region8: #{tpu_custom_call.1} parent=1 // loop_exit
      _
    %513 = vsyncpa [#allocation3], 1
    %s514 = scalar_lea.sflag [#allocation3], 1
    %515 = vsyncpa %s514, 1

</llo_original>
